<compile_context>
chip_gen: v7x
topology: tpu7x:2x2x1
jax: 0.10.0
libtpu: 0.0.40
codegen_flags: <defaults>
</compile_context>

<pallas_src>
import math

import jax
import jax.numpy as jnp
from jax.experimental import pallas as pl
from jax.experimental.pallas import tpu as pltpu

# ----- deterministic loss hyper-parameters (would normally come from __init__) -----
LAMBD1 = 1.0        # weight on reconstruction loss
LAMBD2 = 0.3        # weight on temporal loss
BETA = 1.0          # ReconstructionLoss beta
UMAP_A = 1.0        # UMAP curve parameter a
UMAP_B = 1.0        # UMAP curve parameter b
REPULSION = 1.0     # UMAP repulsion strength
EPS = 1e-4          # UMAP cross-entropy clamp
NEG_RATE = 5        # negative sampling rate

# ----- tiling parameters -----
RECON_TILE_ROWS = 512       # (512,128) f32 tiles per recon slab per grid step
PARAM_TILE_ROWS = 512       # (512,128) f32 tiles per param slab per grid step
PAIRS_PER_TILE = 1024       # 1024 UMAP pairs -> one (8,128) vreg per channel per step

LOG_EPS = math.log(EPS)
NEG_LOG_EPS = -math.log(EPS)


def _pack_rows128(flat, max_tile_rows):
    """Flatten -> zero-pad -> lane-dense (rows, 128) slab. Returns (slab, tile_rows, n_tiles)."""
    n = flat.shape[0]
    pad = (-n) % 128
    if pad:
        flat = jnp.pad(flat, (0, pad))
    rows = flat.shape[0] // 128
    if rows <= max_tile_rows:
        tile = max(8, ((rows + 7) // 8) * 8)        # round up to a multiple of 8 sublanes
        rpad = tile - rows
    else:
        tile = max_tile_rows                        # multiple of 8 by construction
        rpad = (-rows) % tile
    if rpad:
        flat = jnp.pad(flat, (0, rpad * 128))
        rows += rpad
    return flat.reshape(rows, 128), tile, rows // tile


def _make_kernel(n_r, n_u, n_p, grid_size, recon_count, umap_count):
    """Build the fused reduction kernel with static tile counts / element counts."""

    def kernel(edge_ref, recon_ref, a_ref, umap_ref, curr_ref, prev_ref,
               out_ref, racc, uacc, tacc):
        i = pl.program_id(0)

        # -------- init accumulators --------
        @pl.when(i == 0)
        def _init():
            racc[...] = jnp.zeros_like(racc)
            uacc[...] = jnp.zeros_like(uacc)
            tacc[...] = jnp.zeros_like(tacc)

        # -------- reconstruction partial sum --------
        @pl.when(i < n_r)
        def _recon():
            e = edge_ref[...].astype(jnp.float32)
            r = recon_ref[...].astype(jnp.float32)
            a = a_ref[...].astype(jnp.float32)
            if BETA == 1.0:
                w = 1.0 + a
            else:
                w = jnp.power(1.0 + a, BETA)
            racc[...] += jnp.sum(w * jnp.square(e - r), axis=0, keepdims=True)

        # -------- UMAP cross-entropy partial sum --------
        @pl.when(i < n_u)
        def _umap():
            u = umap_ref[...].astype(jnp.float32)          # (1, 6, 8, 128)
            to_x, to_y = u[0, 0], u[0, 1]
            fr_x, fr_y = u[0, 2], u[0, 3]
            pg, pw = u[0, 4], u[0, 5]
            dx = to_x - fr_x
            dy = to_y - fr_y
            d2 = dx * dx + dy * dy
            if UMAP_B == 1.0:
                t = UMAP_A * d2
            else:
                t = UMAP_A * jnp.power(d2, UMAP_B)
            log1pt = jnp.log(1.0 + t)
            # attraction = -pg * log(clip(prob, eps, 1))   with prob = 1/(1+t)
            attraction = pg * jnp.minimum(log1pt, NEG_LOG_EPS)
            # repellent  = -(1-pg) * log(clip(1-prob, eps, 1)) * repulsion
            repellent = -(1.0 - pg) * jnp.maximum(jnp.log(t) - log1pt, LOG_EPS) * REPULSION
            ce = pw * (attraction + repellent)             # (8, 128); padded pairs have pw=0
            uacc[...] += jnp.sum(ce, axis=0, keepdims=True)

        # -------- temporal (parameter drift) partial sum --------
        @pl.when(i < n_p)
        def _temporal():
            d = curr_ref[...].astype(jnp.float32) - prev_ref[...].astype(jnp.float32)
            tacc[...] += jnp.sum(d * d, axis=0, keepdims=True)

        # -------- finalize: normalize, combine, write one lane-padded row --------
        @pl.when(i == grid_size - 1)
        def _finalize():
            recon_l = jnp.sum(racc[...], keepdims=True) / recon_count     # (1,1)
            umap_l = jnp.sum(uacc[...], keepdims=True) / umap_count       # (1,1)
            temporal_l = jnp.sum(tacc[...], keepdims=True)                # (1,1)
            w_recon = LAMBD1 * recon_l
            w_temp = LAMBD2 * temporal_l
            total = umap_l + w_recon + w_temp
            lane = jax.lax.broadcasted_iota(jnp.int32, (1, 128), 1)
            out = jnp.where(lane == 0, umap_l,
                  jnp.where(lane == 1, w_recon,
                  jnp.where(lane == 2, w_temp,
                  jnp.where(lane == 3, total, 0.0))))
            out_ref[...] = out.astype(out_ref.dtype)

    return kernel


def trustal_loss_pallas(edge_to, edge_from, a_to, a_from,
                        curr_params, prev_params,
                        outputs, edge_to_pred, edge_from_pred, *, perm_key):
    embedding_to, embedding_from = outputs["umap"]
    recon_to, recon_from = outputs["recon"]
    B, D = edge_to.shape

    # ---------------- recon stream: fuse to/from, pack lane-dense ----------------
    edge_flat = jnp.concatenate([edge_to.reshape(-1), edge_from.reshape(-1)])
    recon_flat = jnp.concatenate([recon_to.reshape(-1), recon_from.reshape(-1)])
    a_flat = jnp.concatenate([a_to.reshape(-1), a_from.reshape(-1)])
    recon_count = float(2 * B * D)     # 0.5*(mean_to + mean_from) == sum / (2*B*D)
    edge_s, tr_r, n_r = _pack_rows128(edge_flat, RECON_TILE_ROWS)
    recon_s, _, _ = _pack_rows128(recon_flat, RECON_TILE_ROWS)
    a_s, _, _ = _pack_rows128(a_flat, RECON_TILE_ROWS)

    # ---------------- UMAP stream: negative sampling (glue) + lane-dense packing ----------------
    neg_to = jnp.repeat(embedding_to, NEG_RATE, axis=0)
    repeat_from = jnp.repeat(embedding_from, NEG_RATE, axis=0)
    perm = jax.random.permutation(perm_key, B * NEG_RATE)
    neg_from = repeat_from[perm]

    pair_to = jnp.concatenate([embedding_to, neg_to], axis=0)
    pair_from = jnp.concatenate([embedding_from, neg_from], axis=0)
    M = pair_to.shape[0]
    dt = pair_to.dtype
    pg = jnp.concatenate([jnp.ones((B,), dt), jnp.zeros((B * NEG_RATE,), dt)])
    # TODO(synk): the exact prediction-consistency weighting of the injected TrustAL
    # umap_loss is not defined in this module; positive edges are weighted here by
    # predicted-label agreement, negatives keep weight 1.
    agree = (edge_to_pred == edge_from_pred).astype(dt)
    pw = jnp.concatenate([agree, jnp.ones((B * NEG_RATE,), dt)])
    umap_count = float(M)

    Mp = ((M + PAIRS_PER_TILE - 1) // PAIRS_PER_TILE) * PAIRS_PER_TILE
    mpad = Mp - M
    padp = lambda v: jnp.pad(v, (0, mpad)) if mpad else v
    chans = jnp.stack([padp(pair_to[:, 0]), padp(pair_to[:, 1]),
                       padp(pair_from[:, 0]), padp(pair_from[:, 1]),
                       padp(pg), padp(pw)], axis=0)                 # (6, Mp); padded pw = 0
    n_u = Mp // PAIRS_PER_TILE
    umap_s = chans.reshape(6, n_u, 8, 128).transpose(1, 0, 2, 3)    # (n_u, 6, 8, 128)

    # ---------------- temporal stream: flatten model params (glue) ----------------
    def flat_params(params):
        return jnp.concatenate([p.reshape(-1) for p in jax.tree_util.tree_leaves(params)])

    curr_s, tr_p, n_p = _pack_rows128(flat_params(curr_params), PARAM_TILE_ROWS)
    prev_s, _, _ = _pack_rows128(flat_params(prev_params), PARAM_TILE_ROWS)

    # ---------------- pallas call ----------------
    G = max(n_r, n_u, n_p)
    kernel = _make_kernel(n_r, n_u, n_p, G, recon_count, umap_count)

    # Clamped index maps: once a stream runs out of tiles its block index stops changing,
    # so Pallas does not re-DMA it while the other streams finish.
    recon_spec = lambda: pl.BlockSpec((tr_r, 128), lambda i, n=n_r: (jnp.minimum(i, n - 1), 0))
    param_spec = lambda: pl.BlockSpec((tr_p, 128), lambda i, n=n_p: (jnp.minimum(i, n - 1), 0))
    umap_spec = pl.BlockSpec((1, 6, 8, 128),
                             lambda i, n=n_u: (jnp.minimum(i, n - 1), 0, 0, 0))

    out = pl.pallas_call(
        kernel,
        grid=(G,),
        in_specs=[recon_spec(), recon_spec(), recon_spec(),
                  umap_spec,
                  param_spec(), param_spec()],
        out_specs=pl.BlockSpec((1, 128), lambda i: (0, 0)),
        out_shape=jax.ShapeDtypeStruct((1, 128), jnp.float32),
        scratch_shapes=[pltpu.VMEM((1, 128), jnp.float32),
                        pltpu.VMEM((1, 128), jnp.float32),
                        pltpu.VMEM((1, 128), jnp.float32)],
        compiler_params=pltpu.CompilerParams(
            dimension_semantics=("arbitrary",),
            vmem_limit_bytes=32 * 1024 * 1024),
    )(edge_s, recon_s, a_s, umap_s, curr_s, prev_s)

    # Matches: return (umap_l, lambd1 * recon_l, lambd2 * temporal_l, loss)
    return out[0, 0], out[0, 1], out[0, 2], out[0, 3]


# -------------------- tiny visualization model (encoder/decoder) --------------------
def init_model(key, D, H):
    k = jax.random.split(key, 4)
    return {
        "enc_w1": 0.1 * jax.random.normal(k[0], (D, H), jnp.float32),
        "enc_b1": jnp.zeros((H,), jnp.float32),
        "enc_w2": 0.1 * jax.random.normal(k[1], (H, 2), jnp.float32),
        "enc_b2": jnp.zeros((2,), jnp.float32),
        "dec_w1": 0.1 * jax.random.normal(k[2], (2, H), jnp.float32),
        "dec_b1": jnp.zeros((H,), jnp.float32),
        "dec_w2": 0.1 * jax.random.normal(k[3], (H, D), jnp.float32),
        "dec_b2": jnp.zeros((D,), jnp.float32),
    }


def encode(p, x):
    h = jax.nn.relu(x @ p["enc_w1"] + p["enc_b1"])
    return h @ p["enc_w2"] + p["enc_b2"]


def decode(p, z):
    h = jax.nn.relu(z @ p["dec_w1"] + p["dec_b1"])
    return h @ p["dec_w2"] + p["dec_b2"]


if __name__ == "__main__":
    B, D, H = 8, 32, 16
    root = jax.random.PRNGKey(0)
    (k_edge_to, k_edge_from, k_a_to, k_a_from, k_model, k_prev,
     k_pred_to, k_pred_from, k_perm) = jax.random.split(root, 9)

    edge_to = jax.random.normal(k_edge_to, (B, D), jnp.float32)
    edge_from = jax.random.normal(k_edge_from, (B, D), jnp.float32)
    a_to = jax.random.uniform(k_a_to, (B, D), jnp.float32)
    a_from = jax.random.uniform(k_a_from, (B, D), jnp.float32)
    edge_to_pred = jax.random.randint(k_pred_to, (B,), 0, 10)
    edge_from_pred = jax.random.randint(k_pred_from, (B,), 0, 10)

    curr_params = init_model(k_model, D, H)
    prev_params = jax.tree_util.tree_map(
        lambda p, k: p + 0.01 * jax.random.normal(k, p.shape, jnp.float32),
        curr_params,
        dict(zip(curr_params.keys(),
                 jax.random.split(k_prev, len(curr_params)))))

    # outputs dict, as produced by the visualization model (glue)
    emb_to = encode(curr_params, edge_to)
    emb_from = encode(curr_params, edge_from)
    outputs = {
        "umap": (emb_to, emb_from),
        "recon": (decode(curr_params, emb_to), decode(curr_params, emb_from)),
    }

    umap_l, recon_w, temporal_w, total = trustal_loss_pallas(
        edge_to, edge_from, a_to, a_from,
        curr_params, prev_params, outputs,
        edge_to_pred, edge_from_pred, perm_key=k_perm)

    jax.block_until_ready(total)
    print("KERNEL_OK")
</pallas_src>

<mosaic_0001>
module attributes {stable_mosaic.version = 11 : i64} {
  func.func @kernel(%arg0: i32, %arg1: memref<8x128xf32, #tpu.memory_space<vmem>>, %arg2: memref<8x128xf32, #tpu.memory_space<vmem>>, %arg3: memref<8x128xf32, #tpu.memory_space<vmem>>, %arg4: memref<1x6x8x128xf32, #tpu.memory_space<vmem>>, %arg5: memref<16x128xf32, #tpu.memory_space<vmem>>, %arg6: memref<16x128xf32, #tpu.memory_space<vmem>>, %arg7: memref<1x128xf32, #tpu.memory_space<vmem>>, %arg8: memref<1x128xf32, #tpu.memory_space<vmem>>, %arg9: memref<1x128xf32, #tpu.memory_space<vmem>>, %arg10: memref<1x128xf32, #tpu.memory_space<vmem>>) attributes {dimension_semantics = [#tpu.dimension_semantics<arbitrary>], iteration_bounds = array<i64: 1>, scalar_prefetch = 0 : i64, scratch_operands = 3 : i64, tpu.core_type = #tpu.core_type<tc>, window_params = [{transform_indices = @transform_0, window_bounds = array<i64: 8, 128>}, {transform_indices = @transform_1, window_bounds = array<i64: 8, 128>}, {transform_indices = @transform_2, window_bounds = array<i64: 8, 128>}, {transform_indices = @transform_3, window_bounds = array<i64: 1, 6, 8, 128>}, {transform_indices = @transform_4, window_bounds = array<i64: 16, 128>}, {transform_indices = @transform_5, window_bounds = array<i64: 16, 128>}, {pipeline_mode = #tpu.pipeline_mode<synchronous>, transform_indices = @transform_6, window_bounds = array<i64: 1, 128>}]} {
    %c0_i32 = arith.constant 0 : i32
    %0 = arith.cmpi eq, %arg0, %c0_i32 : i32
    %1 = arith.extui %0 : i1 to i32
    %c0_i32_0 = arith.constant 0 : i32
    %2 = arith.cmpi ne, %1, %c0_i32_0 : i32
    scf.if %2 {
      %cst = arith.constant 0.000000e+00 : f32
      %15 = vector.broadcast %cst : f32 to vector<1x128xf32>
      %c0 = arith.constant 0 : index
      %c0_8 = arith.constant 0 : index
      %16 = vector.load %arg8[%c0, %c0_8] : memref<1x128xf32, #tpu.memory_space<vmem>>, vector<1x128xf32>
      tpu.vector_store %arg8[%c0, %c0_8], %15 {strides = array<i32>} : memref<1x128xf32, #tpu.memory_space<vmem>>, vector<1x128xf32>,
      %cst_9 = arith.constant 0.000000e+00 : f32
      %17 = vector.broadcast %cst_9 : f32 to vector<1x128xf32>
      %c0_10 = arith.constant 0 : index
      %c0_11 = arith.constant 0 : index
      %18 = vector.load %arg9[%c0_10, %c0_11] : memref<1x128xf32, #tpu.memory_space<vmem>>, vector<1x128xf32>
      tpu.vector_store %arg9[%c0_10, %c0_11], %17 {strides = array<i32>} : memref<1x128xf32, #tpu.memory_space<vmem>>, vector<1x128xf32>,
      %cst_12 = arith.constant 0.000000e+00 : f32
      %19 = vector.broadcast %cst_12 : f32 to vector<1x128xf32>
      %c0_13 = arith.constant 0 : index
      %c0_14 = arith.constant 0 : index
      %20 = vector.load %arg10[%c0_13, %c0_14] : memref<1x128xf32, #tpu.memory_space<vmem>>, vector<1x128xf32>
      tpu.vector_store %arg10[%c0_13, %c0_14], %19 {strides = array<i32>} : memref<1x128xf32, #tpu.memory_space<vmem>>, vector<1x128xf32>,
    } else {
    }
    %c1_i32 = arith.constant 1 : i32
    %3 = arith.cmpi slt, %arg0, %c1_i32 : i32
    %4 = arith.extui %3 : i1 to i32
    %c0_i32_1 = arith.constant 0 : i32
    %5 = arith.cmpi ne, %4, %c0_i32_1 : i32
    scf.if %5 {
      %c0 = arith.constant 0 : index
      %c0_8 = arith.constant 0 : index
      %15 = vector.load %arg1[%c0, %c0_8] : memref<8x128xf32, #tpu.memory_space<vmem>>, vector<8x128xf32>
      %c0_9 = arith.constant 0 : index
      %c0_10 = arith.constant 0 : index
      %16 = vector.load %arg2[%c0_9, %c0_10] : memref<8x128xf32, #tpu.memory_space<vmem>>, vector<8x128xf32>
      %c0_11 = arith.constant 0 : index
      %c0_12 = arith.constant 0 : index
      %17 = vector.load %arg3[%c0_11, %c0_12] : memref<8x128xf32, #tpu.memory_space<vmem>>, vector<8x128xf32>
      %cst = arith.constant 1.000000e+00 : f32
      %18 = vector.broadcast %cst : f32 to vector<8x128xf32>
      %19 = arith.addf %18, %17 : vector<8x128xf32>
      %c0_13 = arith.constant 0 : index
      %c0_14 = arith.constant 0 : index
      %20 = vector.load %arg8[%c0_13, %c0_14] : memref<1x128xf32, #tpu.memory_space<vmem>>, vector<1x128xf32>
      %21 = arith.subf %15, %16 : vector<8x128xf32>
      %22 = arith.mulf %21, %21 : vector<8x128xf32>
      %23 = arith.mulf %19, %22 : vector<8x128xf32>
      %cst_15 = arith.constant dense<0.000000e+00> : vector<128xf32>
      %24 = vector.multi_reduction <add>, %23, %cst_15 [0] : vector<8x128xf32> to vector<128xf32>
      %25 = vector.shape_cast %24 : vector<128xf32> to vector<1x128xf32>
      %26 = arith.addf %20, %25 : vector<1x128xf32>
      %c0_16 = arith.constant 0 : index
      %c0_17 = arith.constant 0 : index
      %27 = vector.load %arg8[%c0_16, %c0_17] : memref<1x128xf32, #tpu.memory_space<vmem>>, vector<1x128xf32>
      tpu.vector_store %arg8[%c0_16, %c0_17], %26 {strides = array<i32>} : memref<1x128xf32, #tpu.memory_space<vmem>>, vector<1x128xf32>,
    } else {
    }
    %c1_i32_2 = arith.constant 1 : i32
    %6 = arith.cmpi slt, %arg0, %c1_i32_2 : i32
    %7 = arith.extui %6 : i1 to i32
    %c0_i32_3 = arith.constant 0 : i32
    %8 = arith.cmpi ne, %7, %c0_i32_3 : i32
    scf.if %8 {
      %c0 = arith.constant 0 : index
      %c0_8 = arith.constant 0 : index
      %c0_9 = arith.constant 0 : index
      %c0_10 = arith.constant 0 : index
      %15 = vector.load %arg4[%c0, %c0_8, %c0_9, %c0_10] : memref<1x6x8x128xf32, #tpu.memory_space<vmem>>, vector<1x6x8x128xf32>
      %16 = vector.extract_strided_slice %15 {offsets = [0, 0, 0, 0], sizes = [1, 1, 8, 128], strides = [1, 1, 1, 1]} : vector<1x6x8x128xf32> to vector<1x1x8x128xf32>
      %17 = vector.shape_cast %16 : vector<1x1x8x128xf32> to vector<8x128xf32>
      %18 = vector.extract_strided_slice %15 {offsets = [0, 1, 0, 0], sizes = [1, 1, 8, 128], strides = [1, 1, 1, 1]} : vector<1x6x8x128xf32> to vector<1x1x8x128xf32>
      %19 = vector.shape_cast %18 : vector<1x1x8x128xf32> to vector<8x128xf32>
      %20 = vector.extract_strided_slice %15 {offsets = [0, 2, 0, 0], sizes = [1, 1, 8, 128], strides = [1, 1, 1, 1]} : vector<1x6x8x128xf32> to vector<1x1x8x128xf32>
      %21 = vector.shape_cast %20 : vector<1x1x8x128xf32> to vector<8x128xf32>
      %22 = vector.extract_strided_slice %15 {offsets = [0, 3, 0, 0], sizes = [1, 1, 8, 128], strides = [1, 1, 1, 1]} : vector<1x6x8x128xf32> to vector<1x1x8x128xf32>
      %23 = vector.shape_cast %22 : vector<1x1x8x128xf32> to vector<8x128xf32>
      %24 = vector.extract_strided_slice %15 {offsets = [0, 4, 0, 0], sizes = [1, 1, 8, 128], strides = [1, 1, 1, 1]} : vector<1x6x8x128xf32> to vector<1x1x8x128xf32>
      %25 = vector.shape_cast %24 : vector<1x1x8x128xf32> to vector<8x128xf32>
      %26 = vector.extract_strided_slice %15 {offsets = [0, 5, 0, 0], sizes = [1, 1, 8, 128], strides = [1, 1, 1, 1]} : vector<1x6x8x128xf32> to vector<1x1x8x128xf32>
      %27 = vector.shape_cast %26 : vector<1x1x8x128xf32> to vector<8x128xf32>
      %28 = arith.subf %17, %21 : vector<8x128xf32>
      %29 = arith.subf %19, %23 : vector<8x128xf32>
      %30 = arith.mulf %28, %28 : vector<8x128xf32>
      %31 = arith.mulf %29, %29 : vector<8x128xf32>
      %32 = arith.addf %30, %31 : vector<8x128xf32>
      %cst = arith.constant 1.000000e+00 : f32
      %33 = vector.broadcast %cst : f32 to vector<8x128xf32>
      %34 = arith.mulf %33, %32 : vector<8x128xf32>
      %cst_11 = arith.constant 1.000000e+00 : f32
      %35 = vector.broadcast %cst_11 : f32 to vector<8x128xf32>
      %36 = arith.addf %35, %34 : vector<8x128xf32>
      %37 = math.log %36 : vector<8x128xf32>
      %cst_12 = arith.constant 9.21034049 : f32
      %38 = vector.broadcast %cst_12 : f32 to vector<8x128xf32>
      %39 = arith.minimumf %37, %38 : vector<8x128xf32>
      %40 = arith.mulf %25, %39 : vector<8x128xf32>
      %cst_13 = arith.constant 1.000000e+00 : f32
      %41 = vector.broadcast %cst_13 : f32 to vector<8x128xf32>
      %42 = arith.subf %41, %25 : vector<8x128xf32>
      %cst_14 = arith.constant 0.000000e+00 : f32
      %43 = vector.broadcast %cst_14 : f32 to vector<8x128xf32>
      %44 = arith.subf %43, %42 : vector<8x128xf32>
      %45 = math.log %34 : vector<8x128xf32>
      %46 = arith.subf %45, %37 : vector<8x128xf32>
      %cst_15 = arith.constant -9.21034049 : f32
      %47 = vector.broadcast %cst_15 : f32 to vector<8x128xf32>
      %48 = arith.maximumf %46, %47 : vector<8x128xf32>
      %49 = arith.mulf %44, %48 : vector<8x128xf32>
      %cst_16 = arith.constant 1.000000e+00 : f32
      %50 = vector.broadcast %cst_16 : f32 to vector<8x128xf32>
      %51 = arith.mulf %49, %50 : vector<8x128xf32>
      %52 = arith.addf %40, %51 : vector<8x128xf32>
      %53 = arith.mulf %27, %52 : vector<8x128xf32>
      %c0_17 = arith.constant 0 : index
      %c0_18 = arith.constant 0 : index
      %54 = vector.load %arg9[%c0_17, %c0_18] : memref<1x128xf32, #tpu.memory_space<vmem>>, vector<1x128xf32>
      %cst_19 = arith.constant dense<0.000000e+00> : vector<128xf32>
      %55 = vector.multi_reduction <add>, %53, %cst_19 [0] : vector<8x128xf32> to vector<128xf32>
      %56 = vector.shape_cast %55 : vector<128xf32> to vector<1x128xf32>
      %57 = arith.addf %54, %56 : vector<1x128xf32>
      %c0_20 = arith.constant 0 : index
      %c0_21 = arith.constant 0 : index
      %58 = vector.load %arg9[%c0_20, %c0_21] : memref<1x128xf32, #tpu.memory_space<vmem>>, vector<1x128xf32>
      tpu.vector_store %arg9[%c0_20, %c0_21], %57 {strides = array<i32>} : memref<1x128xf32, #tpu.memory_space<vmem>>, vector<1x128xf32>,
    } else {
    }
    %c1_i32_4 = arith.constant 1 : i32
    %9 = arith.cmpi slt, %arg0, %c1_i32_4 : i32
    %10 = arith.extui %9 : i1 to i32
    %c0_i32_5 = arith.constant 0 : i32
    %11 = arith.cmpi ne, %10, %c0_i32_5 : i32
    scf.if %11 {
      %c0 = arith.constant 0 : index
      %c0_8 = arith.constant 0 : index
      %15 = vector.load %arg5[%c0, %c0_8] : memref<16x128xf32, #tpu.memory_space<vmem>>, vector<16x128xf32>
      %c0_9 = arith.constant 0 : index
      %c0_10 = arith.constant 0 : index
      %16 = vector.load %arg6[%c0_9, %c0_10] : memref<16x128xf32, #tpu.memory_space<vmem>>, vector<16x128xf32>
      %17 = arith.subf %15, %16 : vector<16x128xf32>
      %c0_11 = arith.constant 0 : index
      %c0_12 = arith.constant 0 : index
      %18 = vector.load %arg10[%c0_11, %c0_12] : memref<1x128xf32, #tpu.memory_space<vmem>>, vector<1x128xf32>
      %19 = arith.mulf %17, %17 : vector<16x128xf32>
      %cst = arith.constant dense<0.000000e+00> : vector<128xf32>
      %20 = vector.multi_reduction <add>, %19, %cst [0] : vector<16x128xf32> to vector<128xf32>
      %21 = vector.shape_cast %20 : vector<128xf32> to vector<1x128xf32>
      %22 = arith.addf %18, %21 : vector<1x128xf32>
      %c0_13 = arith.constant 0 : index
      %c0_14 = arith.constant 0 : index
      %23 = vector.load %arg10[%c0_13, %c0_14] : memref<1x128xf32, #tpu.memory_space<vmem>>, vector<1x128xf32>
      tpu.vector_store %arg10[%c0_13, %c0_14], %22 {strides = array<i32>} : memref<1x128xf32, #tpu.memory_space<vmem>>, vector<1x128xf32>,
    } else {
    }
    %c0_i32_6 = arith.constant 0 : i32
    %12 = arith.cmpi eq, %arg0, %c0_i32_6 : i32
    %13 = arith.extui %12 : i1 to i32
    %c0_i32_7 = arith.constant 0 : i32
    %14 = arith.cmpi ne, %13, %c0_i32_7 : i32
    scf.if %14 {
      %c0 = arith.constant 0 : index
      %c0_8 = arith.constant 0 : index
      %15 = vector.load %arg8[%c0, %c0_8] : memref<1x128xf32, #tpu.memory_space<vmem>>, vector<1x128xf32>
      %16 = vector.shape_cast %15 : vector<1x128xf32> to vector<1x1x128xf32>
      %cst = arith.constant dense<0.000000e+00> : vector<1xf32>
      %17 = vector.multi_reduction <add>, %16, %cst [1, 2] : vector<1x1x128xf32> to vector<1xf32>
      %18 = vector.shape_cast %17 : vector<1xf32> to vector<1x1x1xf32>
      %19 = vector.extract %18[0, 0, 0] : f32 from vector<1x1x1xf32>
      %20 = vector.broadcast %19 : f32 to vector<1x1xf32>
      %cst_9 = arith.constant 5.120000e+02 : f32
      %21 = vector.broadcast %cst_9 : f32 to vector<1x1xf32>
      %22 = arith.divf %20, %21 : vector<1x1xf32>
      %c0_10 = arith.constant 0 : index
      %c0_11 = arith.constant 0 : index
      %23 = vector.load %arg9[%c0_10, %c0_11] : memref<1x128xf32, #tpu.memory_space<vmem>>, vector<1x128xf32>
      %24 = vector.shape_cast %23 : vector<1x128xf32> to vector<1x1x128xf32>
      %cst_12 = arith.constant dense<0.000000e+00> : vector<1xf32>
      %25 = vector.multi_reduction <add>, %24, %cst_12 [1, 2] : vector<1x1x128xf32> to vector<1xf32>
      %26 = vector.shape_cast %25 : vector<1xf32> to vector<1x1x1xf32>
      %27 = vector.extract %26[0, 0, 0] : f32 from vector<1x1x1xf32>
      %28 = vector.broadcast %27 : f32 to vector<1x1xf32>
      %cst_13 = arith.constant 4.800000e+01 : f32
      %29 = vector.broadcast %cst_13 : f32 to vector<1x1xf32>
      %30 = arith.divf %28, %29 : vector<1x1xf32>
      %c0_14 = arith.constant 0 : index
      %c0_15 = arith.constant 0 : index
      %31 = vector.load %arg10[%c0_14, %c0_15] : memref<1x128xf32, #tpu.memory_space<vmem>>, vector<1x128xf32>
      %32 = vector.shape_cast %31 : vector<1x128xf32> to vector<1x1x128xf32>
      %cst_16 = arith.constant dense<0.000000e+00> : vector<1xf32>
      %33 = vector.multi_reduction <add>, %32, %cst_16 [1, 2] : vector<1x1x128xf32> to vector<1xf32>
      %34 = vector.shape_cast %33 : vector<1xf32> to vector<1x1x1xf32>
      %35 = vector.extract %34[0, 0, 0] : f32 from vector<1x1x1xf32>
      %36 = vector.broadcast %35 : f32 to vector<1x1xf32>
      %cst_17 = arith.constant 1.000000e+00 : f32
      %37 = vector.broadcast %cst_17 : f32 to vector<1x1xf32>
      %38 = arith.mulf %37, %22 : vector<1x1xf32>
      %cst_18 = arith.constant 3.000000e-01 : f32
      %39 = vector.broadcast %cst_18 : f32 to vector<1x1xf32>
      %40 = arith.mulf %39, %36 : vector<1x1xf32>
      %41 = arith.addf %30, %38 : vector<1x1xf32>
      %42 = arith.addf %41, %40 : vector<1x1xf32>
      %43 = tpu.iota {dimensions = array<i32: 1>} : vector<1x128xi32>
      %c0_i32_19 = arith.constant 0 : i32
      %44 = vector.broadcast %c0_i32_19 : i32 to vector<1x128xi32>
      %45 = arith.cmpi eq, %43, %44 : vector<1x128xi32>
      %c1_i32_20 = arith.constant 1 : i32
      %46 = vector.broadcast %c1_i32_20 : i32 to vector<1x128xi32>
      %47 = arith.cmpi eq, %43, %46 : vector<1x128xi32>
      %c2_i32 = arith.constant 2 : i32
      %48 = vector.broadcast %c2_i32 : i32 to vector<1x128xi32>
      %49 = arith.cmpi eq, %43, %48 : vector<1x128xi32>
      %c3_i32 = arith.constant 3 : i32
      %50 = vector.broadcast %c3_i32 : i32 to vector<1x128xi32>
      %51 = arith.cmpi eq, %43, %50 : vector<1x128xi32>
      %cst_21 = arith.constant 0.000000e+00 : f32
      %52 = vector.shape_cast %42 : vector<1x1xf32> to vector<1x1xf32>
      %53 = vector.broadcast %52 : vector<1x1xf32> to vector<1x128xf32>
      %54 = vector.broadcast %cst_21 : f32 to vector<1x128xf32>
      %55 = arith.select %51, %53, %54 : vector<1x128xi1>, vector<1x128xf32>
      %56 = vector.shape_cast %40 : vector<1x1xf32> to vector<1x1xf32>
      %57 = vector.broadcast %56 : vector<1x1xf32> to vector<1x128xf32>
      %58 = arith.select %49, %57, %55 : vector<1x128xi1>, vector<1x128xf32>
      %59 = vector.shape_cast %38 : vector<1x1xf32> to vector<1x1xf32>
      %60 = vector.broadcast %59 : vector<1x1xf32> to vector<1x128xf32>
      %61 = arith.select %47, %60, %58 : vector<1x128xi1>, vector<1x128xf32>
      %62 = vector.shape_cast %30 : vector<1x1xf32> to vector<1x1xf32>
      %63 = vector.broadcast %62 : vector<1x1xf32> to vector<1x128xf32>
      %64 = arith.select %45, %63, %61 : vector<1x128xi1>, vector<1x128xf32>
      %c0_22 = arith.constant 0 : index
      %c0_23 = arith.constant 0 : index
      %65 = vector.load %arg7[%c0_22, %c0_23] : memref<1x128xf32, #tpu.memory_space<vmem>>, vector<1x128xf32>
      tpu.vector_store %arg7[%c0_22, %c0_23], %64 {strides = array<i32>} : memref<1x128xf32, #tpu.memory_space<vmem>>, vector<1x128xf32>,
    } else {
    }
    return
  }
  func.func @transform_0(%arg0: i32) -> (i32, i32) {
    %c0_i32 = arith.constant 0 : i32
    %0 = arith.minsi %arg0, %c0_i32 : i32
    %c0_i32_0 = arith.constant 0 : i32
    %c0_i32_1 = arith.constant 0 : i32
    return %0, %c0_i32_0 : i32, i32
  }
  func.func @transform_1(%arg0: i32) -> (i32, i32) {
    %c0_i32 = arith.constant 0 : i32
    %0 = arith.minsi %arg0, %c0_i32 : i32
    %c0_i32_0 = arith.constant 0 : i32
    %c0_i32_1 = arith.constant 0 : i32
    return %0, %c0_i32_0 : i32, i32
  }
  func.func @transform_2(%arg0: i32) -> (i32, i32) {
    %c0_i32 = arith.constant 0 : i32
    %0 = arith.minsi %arg0, %c0_i32 : i32
    %c0_i32_0 = arith.constant 0 : i32
    %c0_i32_1 = arith.constant 0 : i32
    return %0, %c0_i32_0 : i32, i32
  }
  func.func @transform_3(%arg0: i32) -> (i32, i32, i32, i32) {
    %c0_i32 = arith.constant 0 : i32
    %0 = arith.minsi %arg0, %c0_i32 : i32
    %c0_i32_0 = arith.constant 0 : i32
    %c0_i32_1 = arith.constant 0 : i32
    %c0_i32_2 = arith.constant 0 : i32
    %c0_i32_3 = arith.constant 0 : i32
    return %0, %c0_i32_0, %c0_i32_1, %c0_i32_2 : i32, i32, i32, i32
  }
  func.func @transform_4(%arg0: i32) -> (i32, i32) {
    %c0_i32 = arith.constant 0 : i32
    %0 = arith.minsi %arg0, %c0_i32 : i32
    %c0_i32_0 = arith.constant 0 : i32
    %c0_i32_1 = arith.constant 0 : i32
    return %0, %c0_i32_0 : i32, i32
  }
  func.func @transform_5(%arg0: i32) -> (i32, i32) {
    %c0_i32 = arith.constant 0 : i32
    %0 = arith.minsi %arg0, %c0_i32 : i32
    %c0_i32_0 = arith.constant 0 : i32
    %c0_i32_1 = arith.constant 0 : i32
    return %0, %c0_i32_0 : i32, i32
  }
  func.func @transform_6(%arg0: i32) -> (i32, i32) {
    %c0_i32 = arith.constant 0 : i32
    %c0_i32_0 = arith.constant 0 : i32
    %c0_i32_1 = arith.constant 0 : i32
    return %c0_i32, %c0_i32_0 : i32, i32
  }
}

</mosaic_0001>

<llo_original>
// kernel: tpu_custom_call.1
$region0: #{tpu_custom_call.1}
  #allocation0 [shape = 'u32[]', space=smem, size = 0x4, offset = 0x4, fixed_abs, tag = 'smem constant byte address 0x4 - core index']
  #allocation1 [shape = 'u32[144,128]{1,0:T(1,128)}', space=vmem, size = 0x12000, scoped, tag = 'internal scratch']
  #allocation2 [shape = 'f32[1,128]{1,0:T(1,128)}', space=vmem, size = 0x200, scoped, tag = 'scratch operand']
  #allocation3 [shape = 'f32[1,128]{1,0:T(1,128)}', space=vmem, size = 0x200, scoped, tag = 'scratch operand']
  #allocation4 [shape = 'f32[1,128]{1,0:T(1,128)}', space=vmem, size = 0x200, scoped, tag = 'scratch operand']
  %s0 = inlined_call_operand.hbm [shape: f32[8,128], index: 0, kind: input, shape index: {}]
  %s1 = inlined_call_operand.hbm [shape: f32[8,128], index: 1, kind: input, shape index: {}]
  %s2 = inlined_call_operand.hbm [shape: f32[8,128], index: 2, kind: input, shape index: {}]
  %s3 = inlined_call_operand.hbm [shape: f32[1,6,8,128], index: 3, kind: input, shape index: {}]
  %s4 = inlined_call_operand.hbm [shape: f32[16,128], index: 4, kind: input, shape index: {}]
  %s5 = inlined_call_operand.vmem [shape: f32[16,128], index: 5, kind: input, shape index: {}]
  %s6 = inlined_call_operand.hbm [shape: f32[1,128], index: 6, kind: output, shape index: {}]
  %s7 = sld [smem:[#allocation0]]
  $region66: #{tpu_custom_call.1} parent=0
    _
  %s9 = ssub.s32 1, %s7
  %s10 = scalar_select 0, %s9, %s7
  $region1: #{tpu_custom_call.1} parent=0
    #allocation5 [shape = 'u8[4096]{0}', space=vmem, size = 0x1000, scoped, tag = 'input window, operand 0, single buffered']
    #allocation6 [shape = 's32[1]{0}', space=sflag, size = 0x4, scoped, tag = 'scoped memory for tpu_custom_call.1']
    #allocation7 [shape = 's32[1]{0}', space=sflag, size = 0x4, scoped, tag = 'scoped memory for tpu_custom_call.1']
    #allocation8 [shape = 'u8[4096]{0}', space=vmem, size = 0x1000, scoped, tag = 'input window, operand 1, single buffered']
    #allocation9 [shape = 's32[1]{0}', space=sflag, size = 0x4, scoped, tag = 'scoped memory for tpu_custom_call.1']
    #allocation10 [shape = 'u8[4096]{0}', space=vmem, size = 0x1000, scoped, tag = 'input window, operand 2, single buffered']
    #allocation11 [shape = 'u8[24576]{0}', space=vmem, size = 0x6000, scoped, tag = 'input window, operand 3, single buffered']
    #allocation12 [shape = 's32[1]{0}', space=sflag, size = 0x4, scoped, tag = 'scoped memory for tpu_custom_call.1']
    #allocation13 [shape = 'u8[8192]{0}', space=vmem, size = 0x2000, scoped, tag = 'input window, operand 4, single buffered']
    #allocation14 [shape = 'u8[512]{0}', space=vmem, size = 0x400, scoped, tag = 'output window, operand 0, single buffered']
    %11 = vsyncpa [#allocation6], 0
    %12 = vsyncpa [#allocation9], 0
    %13 = vsyncpa [#allocation12], 0
    %14 = vsyncpa [#allocation7], 0
    // Predicated region
    $region2: #{tpu_custom_call.1} parent=1 // pred_check
      _
    $region3: #{tpu_custom_call.1} parent=1 // pred_check_branch
      %16 = sbr.rel (0) target = $region5
    $region4: #{tpu_custom_call.1} parent=1 // pred_region
      %s18 = ssub.s32 128, 128
      %19 = vsyncadd [#allocation6], %s18
      %s21 = sshll.u32 [#allocation5], 4
      %s22 = int_to_ptr.vmem [resolvable:$true] %s21
      %24 = dma.hbm_to_vmem [thread:$0]  %s0, 128, %s22, [#allocation6]
    $region5: #{tpu_custom_call.1} parent=1 // pred_fallthru
      _
    // Predicated region
    $region6: #{tpu_custom_call.1} parent=1 // pred_check
      _
    $region7: #{tpu_custom_call.1} parent=1 // pred_check_branch
      %26 = sbr.rel (0) target = $region9
    $region8: #{tpu_custom_call.1} parent=1 // pred_region
      %s28 = ssub.s32 128, 128
      %29 = vsyncadd [#allocation9], %s28
      %s31 = sshll.u32 [#allocation8], 4
      %s32 = int_to_ptr.vmem [resolvable:$true] %s31
      %34 = dma.hbm_to_vmem [thread:$0]  %s1, 128, %s32, [#allocation9]
    $region9: #{tpu_custom_call.1} parent=1 // pred_fallthru
      _
    // Predicated region
    $region10: #{tpu_custom_call.1} parent=1 // pred_check
      _
    $region11: #{tpu_custom_call.1} parent=1 // pred_check_branch
      %36 = sbr.rel (0) target = $region13
    $region12: #{tpu_custom_call.1} parent=1 // pred_region
      %s38 = ssub.s32 128, 128
      %39 = vsyncadd [#allocation9], %s38
      %s41 = sshll.u32 [#allocation10], 4
      %s42 = int_to_ptr.vmem [resolvable:$true] %s41
      %44 = dma.hbm_to_vmem [thread:$0]  %s2, 128, %s42, [#allocation9]
    $region13: #{tpu_custom_call.1} parent=1 // pred_fallthru
      _
    // Predicated region
    $region14: #{tpu_custom_call.1} parent=1 // pred_check
      _
    $region15: #{tpu_custom_call.1} parent=1 // pred_check_branch
      %46 = sbr.rel (0) target = $region17
    $region16: #{tpu_custom_call.1} parent=1 // pred_region
      %s48 = ssub.s32 768, 768
      %49 = vsyncadd [#allocation12], %s48
      %s50 = sshll.u32 [#allocation11], 4
      %s51 = int_to_ptr.vmem [resolvable:$true] %s50
      %56 = dma.hbm_to_vmem [thread:$0]  %s3, 768, %s51, [#allocation12], 128, 128, 8
    $region17: #{tpu_custom_call.1} parent=1 // pred_fallthru
      _
    // Predicated region
    $region18: #{tpu_custom_call.1} parent=1 // pred_check
      _
    $region19: #{tpu_custom_call.1} parent=1 // pred_check_branch
      %58 = sbr.rel (0) target = $region21
    $region20: #{tpu_custom_call.1} parent=1 // pred_region
      %s60 = ssub.s32 256, 256
      %61 = vsyncadd [#allocation12], %s60
      %s62 = sshll.u32 [#allocation13], 4
      %s63 = int_to_ptr.vmem [resolvable:$true] %s62
      %68 = dma.hbm_to_vmem [thread:$0]  %s4, 256, %s63, [#allocation12], 128, 128, 8
    $region21: #{tpu_custom_call.1} parent=1 // pred_fallthru
      _
    // Predicated region
    $region22: #{tpu_custom_call.1} parent=1 // pred_check
      _
    $region23: #{tpu_custom_call.1} parent=1 // pred_check_branch
      %70 = sbr.rel (0) target = $region25
    $region24: #{tpu_custom_call.1} parent=1 // pred_region
      _
    $region25: #{tpu_custom_call.1} parent=1 // pred_fallthru
      _
    // Predicated region
    $region26: #{tpu_custom_call.1} parent=1 // pred_check
      _
    $region27: #{tpu_custom_call.1} parent=1 // pred_check_branch
      %72 = sbr.rel (0) target = $region29
    $region28: #{tpu_custom_call.1} parent=1 // pred_region
      %73 = dma.done [#allocation6], 128
    $region29: #{tpu_custom_call.1} parent=1 // pred_fallthru
      _
    // Predicated region
    $region30: #{tpu_custom_call.1} parent=1 // pred_check
      _
    $region31: #{tpu_custom_call.1} parent=1 // pred_check_branch
      %75 = sbr.rel (0) target = $region33
    $region32: #{tpu_custom_call.1} parent=1 // pred_region
      %76 = dma.done [#allocation9], 128
    $region33: #{tpu_custom_call.1} parent=1 // pred_fallthru
      _
    // Predicated region
    $region34: #{tpu_custom_call.1} parent=1 // pred_check
      _
    $region35: #{tpu_custom_call.1} parent=1 // pred_check_branch
      %78 = sbr.rel (0) target = $region37
    $region36: #{tpu_custom_call.1} parent=1 // pred_region
      %79 = dma.done [#allocation9], 128
    $region37: #{tpu_custom_call.1} parent=1 // pred_fallthru
      _
    // Predicated region
    $region38: #{tpu_custom_call.1} parent=1 // pred_check
      _
    $region39: #{tpu_custom_call.1} parent=1 // pred_check_branch
      %81 = sbr.rel (0) target = $region41
    $region40: #{tpu_custom_call.1} parent=1 // pred_region
      %82 = dma.done [#allocation12], 768
    $region41: #{tpu_custom_call.1} parent=1 // pred_fallthru
      _
    // Predicated region
    $region42: #{tpu_custom_call.1} parent=1 // pred_check
      _
    $region43: #{tpu_custom_call.1} parent=1 // pred_check_branch
      %84 = sbr.rel (0) target = $region45
    $region44: #{tpu_custom_call.1} parent=1 // pred_region
      %85 = dma.done [#allocation12], 256
    $region45: #{tpu_custom_call.1} parent=1 // pred_fallthru
      _
    %p86 = scmp.eq.s32.totalorder 0, 0
    // Predicated region
    $region46: #{tpu_custom_call.1} parent=1 // pred_check
      %p87 = pneg %p86
    $region47: #{tpu_custom_call.1} parent=1 // pred_check_branch
      %89 = sbr.rel (%p87) target = $region49
    $region48: #{tpu_custom_call.1} parent=1 // pred_region
      %90 = vst [vmem:[#allocation2] sm:$0x1] 0.0
      %91 = vst [vmem:[#allocation3] sm:$0x1] 0.0
      %92 = vst [vmem:[#allocation4] sm:$0x1] 0.0
    $region49: #{tpu_custom_call.1} parent=1 // pred_fallthru
      _
    %p93 = scmp.lt.s32.totalorder 0, 1
    // Predicated region
    $region50: #{tpu_custom_call.1} parent=1 // pred_check
      %p94 = pneg %p93
    $region51: #{tpu_custom_call.1} parent=1 // pred_check_branch
      %96 = sbr.rel (%p94) target = $region53
    $region52: #{tpu_custom_call.1} parent=1 // pred_region
      %v97 = vld [vmem:[#allocation5] sm:$0xff]
      %v98 = vld [vmem:[#allocation8] sm:$0xff]
      %v99 = vld [vmem:[#allocation10] sm:$0xff]
      %v100 = vadd.f32 %v99, 1.0
      %v101 = vld [vmem:[#allocation2] sm:$0x1]
      %v102 = vsub.f32 %v97, %v98
      %v103 = vmul.f32 %v102, %v102
      %v104 = vmul.f32 %v100, %v103
      %v105 = vrot.slane %v104, 4
      %v106 = vadd.f32 %v104, %v105
      %v107 = vrot.slane %v106, 2
      %v108 = vadd.f32 %v106, %v107
      %v109 = vrot.slane %v108, 1
      %v110 = vadd.f32 %v108, %v109
      %v111 = vadd.f32 %v101, %v110
      %112 = vst [vmem:[#allocation2] sm:$0x1] %v111
      %v113 = vld [vmem:[#allocation11] sm:$0xff]
      %v114 = vld [vmem:[#allocation11 + $0x8] sm:$0xff]
      %v115 = vld [vmem:[#allocation11 + $0x10] sm:$0xff]
      %v116 = vld [vmem:[#allocation11 + $0x18] sm:$0xff]
      %v117 = vld [vmem:[#allocation11 + $0x20] sm:$0xff]
      %v118 = vld [vmem:[#allocation11 + $0x28] sm:$0xff]
      %v119 = vsub.f32 %v113, %v115
      %v120 = vsub.f32 %v114, %v116
      %v121 = vmul.f32 %v119, %v119
      %v122 = vmul.f32 %v120, %v120
      %v123 = vadd.f32 %v121, %v122
      %v124 = vadd.f32 %v123, 1.0
      %v125 = vlog2.pop %v124
      %v126 = vmul.f32 %v125, 0.6931472
      %v127 = vmin.f32 %v126, 9.2103405
      %v128 = vmul.f32 %v117, %v127
      %v129 = vsub.f32 1.0, %v117
      %v130 = vsub.f32 0.0, %v129
      %v131 = vlog2.pop %v123
      %v132 = vmul.f32 %v131, 0.6931472
      %v133 = vsub.f32 %v132, %v126
      %v134 = vmax.f32 %v133, -9.2103405
      %v135 = vmul.f32 %v130, %v134
      %v136 = vadd.f32 %v128, %v135
      %v137 = vmul.f32 %v118, %v136
      %v138 = vld [vmem:[#allocation3] sm:$0x1]
      %v139 = vrot.slane %v137, 4
      %v140 = vadd.f32 %v137, %v139
      %v141 = vrot.slane %v140, 2
      %v142 = vadd.f32 %v140, %v141
      %v143 = vrot.slane %v142, 1
      %v144 = vadd.f32 %v142, %v143
      %v145 = vadd.f32 %v138, %v144
      %146 = vst [vmem:[#allocation3] sm:$0x1] %v145
      %v147 = vld [vmem:[#allocation13] sm:$0xff]
      %v148 = vld [vmem:[#allocation13 + $0x8] sm:$0xff]
      %v149 = vld [vmem:[%s5] sm:$0xff]
      %v150 = vld [vmem:[%s5 + $0x8] sm:$0xff]
      %v151 = vsub.f32 %v147, %v149
      %v152 = vsub.f32 %v148, %v150
      %v153 = vld [vmem:[#allocation4] sm:$0x1]
      %v154 = vmul.f32 %v151, %v151
      %v155 = vmul.f32 %v152, %v152
      %v156 = vadd.f32 %v154, %v155
      %v157 = vrot.slane %v156, 4
      %v158 = vadd.f32 %v156, %v157
      %v159 = vrot.slane %v158, 2
      %v160 = vadd.f32 %v158, %v159
      %v161 = vrot.slane %v160, 1
      %v162 = vadd.f32 %v160, %v161
      %v163 = vadd.f32 %v153, %v162
      %164 = vst [vmem:[#allocation4] sm:$0x1] %v163
    $region53: #{tpu_custom_call.1} parent=1 // pred_fallthru
      _
    // Predicated region
    $region54: #{tpu_custom_call.1} parent=1 // pred_check
      %p165 = pneg %p86
    $region55: #{tpu_custom_call.1} parent=1 // pred_check_branch
      %167 = sbr.rel (%p165) target = $region57
    $region56: #{tpu_custom_call.1} parent=1 // pred_region
      %v168 = vld [vmem:[#allocation2] sm:$0x1]
      %vm169 = vcmask 1040384
      %v170 = vsel %vm169, %v168, 0.0
      %171 = vadd.xlane.f32.xlu0 %v170
      %v172 = vpop.xlane.xlu0 %171
      %v173 = vrot.slane %v172, 4
      %v174 = vadd.f32 %v172, %v173
      %v175 = vrot.slane %v174, 2
      %v176 = vadd.f32 %v174, %v175
      %v177 = vrot.slane %v176, 1
      %v178 = vadd.f32 %v176, %v177
      %s179 = vtos %v178
      %v180 = vstv %s179
      %v181 = vrcp.pop 512.0
      %v182 = vmul.f32 %v180, %v181
      %v183 = vld [vmem:[#allocation3] sm:$0x1]
      %v184 = vsel %vm169, %v183, 0.0
      %185 = vadd.xlane.f32.xlu0 %v184
      %v186 = vpop.xlane.xlu0 %185
      %v187 = vrot.slane %v186, 4
      %v188 = vadd.f32 %v186, %v187
      %v189 = vrot.slane %v188, 2
      %v190 = vadd.f32 %v188, %v189
      %v191 = vrot.slane %v190, 1
      %v192 = vadd.f32 %v190, %v191
      %s193 = vtos %v192
      %v194 = vstv %s193
      %v195 = vrcp.pop 48.0
      %v196 = vmul.f32 %v194, %v195
      %v197 = vld [vmem:[#allocation4] sm:$0x1]
      %v198 = vsel %vm169, %v197, 0.0
      %199 = vadd.xlane.f32.xlu0 %v198
      %v200 = vpop.xlane.xlu0 %199
      %v201 = vrot.slane %v200, 4
      %v202 = vadd.f32 %v200, %v201
      %v203 = vrot.slane %v202, 2
      %v204 = vadd.f32 %v202, %v203
      %v205 = vrot.slane %v204, 1
      %v206 = vadd.f32 %v204, %v205
      %s207 = vtos %v206
      %v208 = vstv %s207
      %v209 = vmul.f32 %v208, 0.3
      %v210 = vadd.f32 %v196, %v182
      %v211 = vadd.f32 %v210, %v209
      %v212 = vlaneseq
      %v213 = vand.u32 %v212, 127
      %vm214 = vcmp.eq.s32.totalorder %v213, 0
      %vm215 = vcmp.eq.s32.totalorder %v213, 1
      %vm216 = vcmp.eq.s32.totalorder %v213, 2
      %vm217 = vcmp.eq.s32.totalorder %v213, 3
      %v218 = vsel %vm217, %v211, 0.0
      %v219 = vsel %vm216, %v209, %v218
      %v220 = vsel %vm215, %v182, %v219
      %v221 = vsel %vm214, %v196, %v220
      %222 = vst [vmem:[#allocation14] sm:$0x1] %v221
    $region57: #{tpu_custom_call.1} parent=1 // pred_fallthru
      _
    // Predicated region
    $region58: #{tpu_custom_call.1} parent=1 // pred_check
      _
    $region59: #{tpu_custom_call.1} parent=1 // pred_check_branch
      %224 = sbr.rel (0) target = $region61
    $region60: #{tpu_custom_call.1} parent=1 // pred_region
      %s226 = ssub.s32 16, 16
      %227 = vsyncadd [#allocation7], %s226
      %s229 = sshll.u32 [#allocation14], 4
      %s230 = int_to_ptr.vmem [resolvable:$true] %s229
      %232 = dma.vmem_to_hbm [thread:$0]  %s230, 16, %s6, [#allocation7]
    $region61: #{tpu_custom_call.1} parent=1 // pred_fallthru
      _
    // Predicated region
    $region62: #{tpu_custom_call.1} parent=1 // pred_check
      _
    $region63: #{tpu_custom_call.1} parent=1 // pred_check_branch
      %234 = sbr.rel (0) target = $region65
    $region64: #{tpu_custom_call.1} parent=1 // pred_region
      %235 = dma.done [#allocation7], 16
    $region65: #{tpu_custom_call.1} parent=1 // pred_fallthru
      _
    %236 = vsyncpa [#allocation6], 1
    %237 = vsyncpa [#allocation9], 1
    %238 = vsyncpa [#allocation12], 1
    %239 = vsyncpa [#allocation7], 1

</llo_original>
